<compile_context>
chip_gen: v6e
topology: v6e:2x2x1
jax: 0.10.0
libtpu: 0.0.40
codegen_flags: <defaults>
</compile_context>

<pallas_src>
import functools

import numpy as np
import jax
import jax.numpy as jnp
from jax.experimental import pallas as pl
from jax.experimental.pallas import tpu as pltpu


def _cdiv(a, b):
    return -(-a // b)


def _round_up(a, m):
    return _cdiv(a, m) * m


# ----------------------------- Pallas kernel ------------------------------- #
def _decoupled_kernel(x_ref,        # VMEM (TB, F)       compute dtype
                      wcomb_ref,    # VMEM (F, OUT_P)    compute dtype (batch-invariant)
                      bias_ref,     # VMEM (1, OUT_P)    float32       (batch-invariant)
                      o_ref):       # VMEM (TB, OUT_P)   out dtype
    # Single lane-dense matmul per batch tile; bias broadcasts over rows.
    o_ref[...] = (jnp.dot(x_ref[...], wcomb_ref[...],
                          preferred_element_type=jnp.float32)
                  + bias_ref[...]).astype(o_ref.dtype)


def decoupled_forward_pallas(x, mask, params,
                             compute_dtype=jnp.bfloat16,
                             out_dtype=jnp.float32):
    """x: [B, C*F_BLK], mask: bool[C], params: dict of weights."""
    w_feat, b_feat, w_fus, b_fus = (params["w_feat"], params["b_feat"],
                                    params["w_fus"], params["b_fus"])
    C, F_BLK, H = w_feat.shape
    OUT = w_fus.shape[-1]
    B = x.shape[0]
    F = C * F_BLK

    # ---- batch-invariant weight/bias collapse (hoisted out of the kernel) ----
    # Tiny param-space ops (no batch factor); the mask folds in as a per-client
    # scalar so dropped clients contribute exactly zero to W_comb and bias.
    mask_f = mask.astype(jnp.float32)
    w_comb = jnp.einsum("cfh,cho->cfo", w_feat, w_fus)            # (C, F_BLK, OUT)
    w_comb = (w_comb * mask_f[:, None, None]).reshape(F, OUT)      # (F, OUT)
    bias = b_fus + jnp.einsum("ch,cho->o", b_feat * mask_f[:, None], w_fus)

    # Lane-dense output: pad OUT up to a multiple of 128 (zero columns).
    OUT_P = max(128, _round_up(OUT, 128))
    pad_o = OUT_P - OUT
    if pad_o:
        w_comb = jnp.pad(w_comb, ((0, 0), (0, pad_o)))
        bias = jnp.pad(bias, ((0, pad_o),))

    # Compute-dtype operands (accumulation stays f32 inside the kernel).
    xc = x.astype(compute_dtype)                     # [B, F] — used as-is, no transpose
    w_comb_c = w_comb.astype(compute_dtype)          # [F, OUT_P]
    bias_2d = bias.reshape(1, OUT_P).astype(jnp.float32)

    # ---- batch tiling ("parallel" axis -> shards across v7x's two TCs) ----
    TB_CAP = 2048
    B8 = _round_up(B, 8)
    nb = _cdiv(B8, TB_CAP)
    if B8 >= 16:
        nb = max(nb, 2)                              # >=2 tiles when batch allows (v7x)
    TB = _round_up(_cdiv(B8, nb), 8)
    nb = _cdiv(B8, TB)
    Bp = nb * TB
    if Bp != B:
        xc = jnp.pad(xc, ((0, Bp - B), (0, 0)))

    # ---- explicit VMEM budget (double-buffered inputs/outputs + headroom) ----
    cbytes = np.dtype(compute_dtype).itemsize
    obytes = np.dtype(out_dtype).itemsize
    vmem_need = (2 * TB * F * cbytes            # x tile
                 + 2 * F * OUT_P * cbytes       # W_comb (constant block index)
                 + 2 * OUT_P * 4                # bias
                 + 2 * TB * OUT_P * obytes)     # output tile
    vmem_limit = int(min(64 << 20, max(16 << 20, 2 * vmem_need)))

    grid_spec = pltpu.PrefetchScalarGridSpec(
        num_scalar_prefetch=0,
        grid=(nb,),
        in_specs=[
            pl.BlockSpec((TB, F), lambda i: (i, 0)),       # x batch tile
            # Batch-invariant blocks (constant index_map).  If C/H/OUT scale up,
            # these could use pipeline_mode=pl.Buffered(1) to halve their VMEM.
            pl.BlockSpec((F, OUT_P), lambda i: (0, 0)),    # W_comb
            pl.BlockSpec((1, OUT_P), lambda i: (0, 0)),    # bias
        ],
        out_specs=pl.BlockSpec((TB, OUT_P), lambda i: (i, 0)),
    )

    out_p = pl.pallas_call(
        _decoupled_kernel,
        out_shape=jax.ShapeDtypeStruct((Bp, OUT_P), out_dtype),
        grid_spec=grid_spec,
        compiler_params=pltpu.CompilerParams(
            dimension_semantics=("parallel",),
            vmem_limit_bytes=vmem_limit),
    )(xc, w_comb_c, bias_2d)

    # For very large B/OUT prefer consuming the padded slab downstream (the
    # slice is an extra HBM pass); at these sizes it is negligible.
    if Bp != B or pad_o:
        return out_p[:B, :OUT]
    return out_p


# ----------------------------- host-side glue ------------------------------ #
def drop_mask(key, plug_mask, p_drop):
    """JAX port of drop_mask: drop entries w.p. p_drop, last element never dropped."""
    keep = jax.random.uniform(key, plug_mask.shape, jnp.float32) >= p_drop
    keep = keep.at[-1].set(True)
    return plug_mask & keep


@functools.partial(jax.jit,
                   static_argnames=("p_drop", "compute_dtype", "out_dtype"))
def base_decoupled_forward(params, x, plug_mask=None, p_drop=0.0, key=None,
                           compute_dtype=jnp.bfloat16, out_dtype=jnp.float32):
    C = params["w_feat"].shape[0]
    if plug_mask is not None:
        new_mask = drop_mask(key, plug_mask, p_drop)
    else:
        new_mask = jnp.ones((C,), dtype=bool)
    return decoupled_forward_pallas(x, new_mask, params,
                                    compute_dtype=compute_dtype,
                                    out_dtype=out_dtype)


def init_params(key, num_clients, f_blk, hidden, out):
    ks = jax.random.split(key, 4)
    scale_f = 1.0 / jnp.sqrt(f_blk)
    scale_u = 1.0 / jnp.sqrt(num_clients * hidden)
    return {
        "w_feat": jax.random.normal(ks[0], (num_clients, f_blk, hidden),
                                    jnp.float32) * scale_f,
        "b_feat": jax.random.normal(ks[1], (num_clients, hidden),
                                    jnp.float32) * 0.01,
        "w_fus": jax.random.normal(ks[2], (num_clients, hidden, out),
                                   jnp.float32) * scale_u,
        "b_fus": jax.random.normal(ks[3], (out,), jnp.float32) * 0.01,
    }


def reference_forward(params, x, mask):
    """Pure-JAX reference (per-client extract -> mask -> concat -> fuse)."""
    C, F_BLK, H = params["w_feat"].shape
    B = x.shape[0]
    xb = x.reshape(B, C, F_BLK)
    embs = []
    for i in range(C):
        e = xb[:, i, :] @ params["w_feat"][i] + params["b_feat"][i]
        e = jnp.where(mask[i], e, jnp.zeros_like(e))
        embs.append(e)
    cat = jnp.concatenate(embs, axis=-1)                      # [B, C*H]
    w_fus_full = params["w_fus"].reshape(C * H, -1)
    return cat @ w_fus_full + params["b_fus"]


# --------------------------------- main ------------------------------------ #
if __name__ == "__main__":
    NUM_CLIENTS, F_BLK, HIDDEN, OUT, BATCH = 4, 16, 32, 8, 8

    root = jax.random.PRNGKey(0)
    k_param, k_x, k_drop = jax.random.split(root, 3)

    params = init_params(k_param, NUM_CLIENTS, F_BLK, HIDDEN, OUT)
    x = jax.random.normal(k_x, (BATCH, NUM_CLIENTS * F_BLK), jnp.float32)

    # Case 1: no plug_mask (all clients present), default bf16 compute.
    out_full = jax.block_until_ready(base_decoupled_forward(params, x))

    # Case 2: plug_mask + p_drop (training-style masking), default bf16 compute.
    plug_mask = jnp.array([True, False, True, True])
    out_masked = jax.block_until_ready(
        base_decoupled_forward(params, x, plug_mask=plug_mask,
                               p_drop=0.3, key=k_drop))

    # Case 3: explicit f32 compute path, unmasked (tight-tolerance check).
    out_f32 = jax.block_until_ready(
        base_decoupled_forward(params, x, compute_dtype=jnp.float32))

    # Sanity checks against the pure-JAX reference (same effective masks).
    full_mask = jnp.ones((NUM_CLIENTS,), bool)
    ref_full = reference_forward(params, x, full_mask)
    assert jnp.allclose(out_full, ref_full, atol=5e-2, rtol=5e-2)   # bf16 operands

    eff_mask = drop_mask(k_drop, plug_mask, 0.3)
    ref_masked = reference_forward(params, x, eff_mask)
    assert jnp.allclose(out_masked, ref_masked, atol=5e-2, rtol=5e-2)

    assert jnp.allclose(out_f32, ref_full, atol=1e-3, rtol=1e-3)

    assert out_full.shape == (BATCH, OUT) and out_masked.shape == (BATCH, OUT)
    print("KERNEL_OK")
</pallas_src>

<mosaic_0001>
module attributes {stable_mosaic.version = 11 : i64} {
  func.func @_decoupled_kernel(%arg0: i32, %arg1: memref<8x64xbf16, #tpu.memory_space<vmem>>, %arg2: memref<64x128xbf16, #tpu.memory_space<vmem>>, %arg3: memref<1x128xf32, #tpu.memory_space<vmem>>, %arg4: memref<8x128xf32, #tpu.memory_space<vmem>>) attributes {dimension_semantics = [#tpu.dimension_semantics<parallel>], iteration_bounds = array<i64: 1>, scalar_prefetch = 0 : i64, scratch_operands = 0 : i64, tpu.core_type = #tpu.core_type<tc>, window_params = [{transform_indices = @transform_0, window_bounds = array<i64: 8, 64>}, {pipeline_mode = #tpu.pipeline_mode<synchronous>, transform_indices = @transform_1, window_bounds = array<i64: 64, 128>}, {pipeline_mode = #tpu.pipeline_mode<synchronous>, transform_indices = @transform_2, window_bounds = array<i64: 1, 128>}, {transform_indices = @transform_3, window_bounds = array<i64: 8, 128>}]} {
    %c0 = arith.constant 0 : index
    %c0_0 = arith.constant 0 : index
    %0 = vector.load %arg1[%c0, %c0_0] : memref<8x64xbf16, #tpu.memory_space<vmem>>, vector<8x64xbf16>
    %c0_1 = arith.constant 0 : index
    %c0_2 = arith.constant 0 : index
    %1 = vector.load %arg2[%c0_1, %c0_2] : memref<64x128xbf16, #tpu.memory_space<vmem>>, vector<64x128xbf16>
    %cst = arith.constant dense<0.000000e+00> : vector<8x128xf32>
    %2 = tpu.matmul %0, %1, %cst {dimension_numbers = #tpu.dot_dimension_numbers<[1], [0], [0], [1], [0, 0, 1, 1], [], []>} : vector<8x64xbf16>, vector<64x128xbf16>, vector<8x128xf32> -> vector<8x128xf32>
    %c0_3 = arith.constant 0 : index
    %c0_4 = arith.constant 0 : index
    %3 = vector.load %arg3[%c0_3, %c0_4] : memref<1x128xf32, #tpu.memory_space<vmem>>, vector<1x128xf32>
    %4 = vector.broadcast %3 : vector<1x128xf32> to vector<8x128xf32>
    %5 = arith.addf %2, %4 : vector<8x128xf32>
    %c0_5 = arith.constant 0 : index
    %c0_6 = arith.constant 0 : index
    %6 = vector.load %arg4[%c0_5, %c0_6] : memref<8x128xf32, #tpu.memory_space<vmem>>, vector<8x128xf32>
    tpu.vector_store %arg4[%c0_5, %c0_6], %5 {strides = array<i32>} : memref<8x128xf32, #tpu.memory_space<vmem>>, vector<8x128xf32>,
    return
  }
  func.func @transform_0(%arg0: i32) -> (i32, i32) {
    %c0_i32 = arith.constant 0 : i32
    %c0_i32_0 = arith.constant 0 : i32
    return %arg0, %c0_i32 : i32, i32
  }
  func.func @transform_1(%arg0: i32) -> (i32, i32) {
    %c0_i32 = arith.constant 0 : i32
    %c0_i32_0 = arith.constant 0 : i32
    %c0_i32_1 = arith.constant 0 : i32
    return %c0_i32, %c0_i32_0 : i32, i32
  }
  func.func @transform_2(%arg0: i32) -> (i32, i32) {
    %c0_i32 = arith.constant 0 : i32
    %c0_i32_0 = arith.constant 0 : i32
    %c0_i32_1 = arith.constant 0 : i32
    return %c0_i32, %c0_i32_0 : i32, i32
  }
  func.func @transform_3(%arg0: i32) -> (i32, i32) {
    %c0_i32 = arith.constant 0 : i32
    %c0_i32_0 = arith.constant 0 : i32
    return %arg0, %c0_i32 : i32, i32
  }
}

</mosaic_0001>

<llo_original>
// kernel: base_decoupled_forward.1
$region0: #{base_decoupled_forward.1}
  #allocation0 [shape = 'u32[]', space=smem, size = 0x4, offset = 0x4, fixed_abs, tag = 'smem constant byte address 0x4 - core index']
  #allocation1 [shape = 'u32[144,128]{1,0:T(1,128)}', space=vmem, size = 0x12000, scoped, tag = 'internal scratch']
  %s0 = inlined_call_operand.vmem [shape: bf16[8,64], index: 0, kind: input, shape index: {}]
  %s1 = inlined_call_operand.vmem [shape: bf16[64,128], index: 1, kind: input, shape index: {}]
  %s2 = inlined_call_operand.vmem [shape: f32[1,128], index: 2, kind: input, shape index: {}]
  %s3 = inlined_call_operand.hbm [shape: f32[8,128], index: 3, kind: output, shape index: {}]
  %s4 = sld [smem:[#allocation0]]
  $region22: #{base_decoupled_forward.1} parent=0
    _
  %s6 = ssub.s32 1, %s4
  %s7 = scalar_select 0, %s6, %s4
  $region1: #{base_decoupled_forward.1} parent=0
    #allocation2 [shape = 'u8[4096]{0}', space=vmem, size = 0x1000, scoped, tag = 'output window, operand 0, single buffered']
    #allocation3 [shape = 's32[1]{0}', space=sflag, size = 0x4, scoped, tag = 'scoped memory for base_decoupled_forward.1']
    %8 = vsyncpa [#allocation3], 0
    // Predicated region
    $region2: #{base_decoupled_forward.1} parent=1 // pred_check
      _
    $region3: #{base_decoupled_forward.1} parent=1 // pred_check_branch
      %10 = sbr.rel (0) target = $region5
    $region4: #{base_decoupled_forward.1} parent=1 // pred_region
      _
    $region5: #{base_decoupled_forward.1} parent=1 // pred_fallthru
      _
    // Predicated region
    $region6: #{base_decoupled_forward.1} parent=1 // pred_check
      _
    $region7: #{base_decoupled_forward.1} parent=1 // pred_check_branch
      %12 = sbr.rel (0) target = $region9
    $region8: #{base_decoupled_forward.1} parent=1 // pred_region
      _
    $region9: #{base_decoupled_forward.1} parent=1 // pred_fallthru
      _
    // Predicated region
    $region10: #{base_decoupled_forward.1} parent=1 // pred_check
      _
    $region11: #{base_decoupled_forward.1} parent=1 // pred_check_branch
      %14 = sbr.rel (0) target = $region13
    $region12: #{base_decoupled_forward.1} parent=1 // pred_region
      _
    $region13: #{base_decoupled_forward.1} parent=1 // pred_fallthru
      _
    %v16 = vld [vmem:[%s0] sm:$0xf]
    %v17 = vld [vmem:[%s1] sm:$0xf]
    %v18 = vld [vmem:[%s1 + $0x4] sm:$0xf]
    %v19 = vld [vmem:[%s1 + $0x8] sm:$0xf]
    %v20 = vld [vmem:[%s1 + $0xc] sm:$0xf]
    %v21 = vld [vmem:[%s1 + $0x10] sm:$0xf]
    %v22 = vld [vmem:[%s1 + $0x14] sm:$0xf]
    %v23 = vld [vmem:[%s1 + $0x18] sm:$0xf]
    %v24 = vld [vmem:[%s1 + $0x1c] sm:$0xf]
    %v25 = vld [vmem:[%s2] sm:$0x1]
    %v27 = vlaneseq
    %v28 = vshrl.u32 %v27, 7
    %v29 = vsub.s32 0, %v28
    %v30 = vrot.slane %v25, %v29
    %v40 = vunpack.c.l.b16 %v17
    %v41 = vunpack.c.l.b16 %v18
    %v42 = vunpack.c.l.b16 %v19
    %v43 = vunpack.c.l.b16 %v20
    %v44 = vunpack.c.l.b16 %v21
    %v45 = vunpack.c.l.b16 %v22
    %v46 = vunpack.c.l.b16 %v23
    %v47 = vunpack.c.l.b16 %v24
    %v48 = vpack.c.b16 %v41, %v40
    %v49 = vpack.c.b16 %v43, %v42
    %v50 = vpack.c.b16 %v45, %v44
    %v51 = vpack.c.b16 %v47, %v46
    %vm56 = vcmask 523264
    %v58 = vsel %vm56, %v16, 0
    %60 = vmatprep.subr.bf16.mxu0 0
    %61 = vmatpush1.bf16.msra.mxu0 0
    %62 = vmatprep.subr.bf16.mxu0 0
    %63 = vmatpush1.bf16.msra.mxu0 0
    %64 = vmatprep.subr.bf16.mxu0 0
    %65 = vmatpush1.bf16.msra.mxu0 0
    %66 = vmatprep.subr.bf16.mxu0 0
    %67 = vmatpush1.bf16.msra.mxu0 0
    %68 = vmatprep.subr.bf16.mxu0 0
    %69 = vmatpush1.bf16.msra.mxu0 %v51
    %70 = vmatprep.subr.bf16.mxu0 0
    %71 = vmatpush1.bf16.msra.mxu0 %v50
    %72 = vmatprep.subr.bf16.mxu0 0
    %73 = vmatpush1.bf16.msra.mxu0 %v49
    %74 = vmatprep.subr.bf16.mxu0 0
    %75 = vmatpush1.bf16.msra.mxu0 %v48
    %76 = vmatprep.subr.bf16.mxu0 0
    %77 = vmatpush2.bf16.msra.mxu0 0
    %78 = vmatprep.subr.bf16.mxu0 0
    %79 = vmatpush2.bf16.msra.mxu0 0
    %80 = vmatprep.subr.bf16.mxu0 0
    %81 = vmatpush2.bf16.msra.mxu0 0
    %82 = vmatprep.subr.bf16.mxu0 0
    %83 = vmatpush2.bf16.msra.mxu0 0
    %84 = vmatprep.subr.bf16.mxu0 0
    %85 = vmatpush2.bf16.msra.mxu0 0
    %86 = vmatprep.subr.bf16.mxu0 0
    %87 = vmatpush2.bf16.msra.mxu0 0
    %88 = vmatprep.subr.bf16.mxu0 0
    %89 = vmatpush2.bf16.msra.mxu0 0
    %90 = vmatprep.subr.bf16.mxu0 0
    %91 = vmatpush2.bf16.msra.mxu0 0
    %92 = vmatprep.mubr.bf16.mxu0 0
    %93 = vmatmul.mubr.bf16.gmra.mxu0 %v58
    %v94 = vpop.f32.mrf.mxu0
    %v95 = vadd.f32 %v30, %v94
    %v96 = vpop.f32.mrf.mxu0
    %v97 = vpop.f32.mrf.mxu0
    %v98 = vpop.f32.mrf.mxu0
    %99 = vdwg.mxu0
    %100 = vst [vmem:[#allocation2] sm:$0xff] %v95
    // Predicated region
    $region14: #{base_decoupled_forward.1} parent=1 // pred_check
      _
    $region15: #{base_decoupled_forward.1} parent=1 // pred_check_branch
      %102 = sbr.rel (0) target = $region17
    $region16: #{base_decoupled_forward.1} parent=1 // pred_region
      %s104 = ssub.s32 128, 128
      %105 = vsyncadd [#allocation3], %s104
      %s107 = sshll.u32 [#allocation2], 4
      %s108 = int_to_ptr.vmem [resolvable:$true] %s107
      %110 = dma.vmem_to_hbm [thread:$0]  %s108, 128, %s3, [#allocation3]
    $region17: #{base_decoupled_forward.1} parent=1 // pred_fallthru
      _
    // Predicated region
    $region18: #{base_decoupled_forward.1} parent=1 // pred_check
      _
    $region19: #{base_decoupled_forward.1} parent=1 // pred_check_branch
      %112 = sbr.rel (0) target = $region21
    $region20: #{base_decoupled_forward.1} parent=1 // pred_region
      %113 = dma.done [#allocation3], 128
    $region21: #{base_decoupled_forward.1} parent=1 // pred_fallthru
      _
    %114 = vsyncpa [#allocation3], 1

</llo_original>
